<compile_context>
chip_gen: v5e
topology: v5e:2x2
jax: 0.10.0
libtpu: 0.0.40
codegen_flags: <defaults>
</compile_context>

<pallas_src>
import jax
import jax.numpy as jnp
from jax.experimental import pallas as pl
from jax.experimental.pallas import tpu as pltpu


def _cdiv(a, b):
    return -(-a // b)


def _round_up(v, m):
    return _cdiv(v, m) * m


def _choose_tile(dim, max_tile, align):
    """Aligned tile <= ~max_tile with balanced blocks (minimizes padding)."""
    max_tile = max(align, (max_tile // align) * align)
    nblocks = _cdiv(dim, max_tile)
    return _round_up(_cdiv(dim, nblocks), align)


def _default_vmem_limit_bytes():
    # Generation-aware scoped-VMEM limit: leave headroom on 64 MiB parts (v7x),
    # use most of the 128 MiB on v5e/v6e. Fallback is safe on every generation.
    try:
        cap = int(pltpu.get_tpu_info().vmem_capacity_bytes)
        return max(32 * 1024 * 1024, min(int(cap * 0.8), 112 * 1024 * 1024))
    except Exception:
        return 48 * 1024 * 1024


def _lora_linear_kernel(x_ref, wt_ref, b_ref, xa_ref, bs_ref, o_ref, acc_ref):
    # x_ref  : (TM, TK)      input tile (compute dtype)
    # wt_ref : (TK, TN)      W^T tile (compute dtype)
    # b_ref  : (1, TN)       bias tile, f32
    # xa_ref : (TM, rank)    precomputed x@A tile, f32 (depends on i only)
    # bs_ref : (rank, TN)    alpha*B tile, f32 (depends on j only)
    # o_ref  : (TM, TN)      output tile
    # acc_ref: (TM, TN) f32  accumulator scratch, resident across the K axis
    k = pl.program_id(2)
    partial = jnp.dot(x_ref[...], wt_ref[...], preferred_element_type=jnp.float32)

    @pl.when(k == 0)
    def _init():
        acc_ref[...] = partial          # direct assign: no zero-init + RMW

    @pl.when(k > 0)
    def _accumulate():
        acc_ref[...] += partial

    @pl.when(k == pl.num_programs(2) - 1)
    def _finalize():
        # Rank-r LoRA epilogue: done once per output tile, in f32.
        lora = jnp.dot(xa_ref[...], bs_ref[...], preferred_element_type=jnp.float32)
        o_ref[...] = (acc_ref[...] + b_ref[...] + lora).astype(o_ref.dtype)


def prepare_lora_linear_params(w, b, A, B, alpha, *, tn=1024, tk=512,
                               compute_dtype=None):
    """One-time (parameter-load) prep: W transpose + pad, alpha folded into B."""
    out_features, in_features = w.shape
    rank = A.shape[-1]

    TN = _choose_tile(out_features, tn, 128)
    TK = _choose_tile(in_features, tk, 128)
    N_pad = _round_up(out_features, TN)
    K_pad = _round_up(in_features, TK)

    wt = jnp.transpose(w)
    if compute_dtype is not None:
        wt = wt.astype(compute_dtype)
    wt_p = jnp.pad(wt, ((0, K_pad - in_features), (0, N_pad - out_features)))

    b_p = jnp.pad(b.astype(jnp.float32).reshape(1, out_features),
                  ((0, 0), (0, N_pad - out_features)))

    # Fold alpha into B once; kept in f32 (tiny) for the f32 epilogue.
    bs_p = jnp.pad(jnp.float32(alpha) * B.astype(jnp.float32),
                   ((0, 0), (0, N_pad - out_features)))

    return dict(in_features=in_features, out_features=out_features, rank=rank,
                TN=TN, TK=TK, N_pad=N_pad, K_pad=K_pad,
                compute_dtype=compute_dtype,
                wt_p=wt_p, b_p=b_p, bs_p=bs_p, A=A)


def lora_linear_forward(x, params, *, tm=512):
    """x: (..., in_features) -> (..., out_features)."""
    in_features = params["in_features"]
    out_features = params["out_features"]
    rank = params["rank"]
    TN, TK = params["TN"], params["TK"]
    N_pad, K_pad = params["N_pad"], params["K_pad"]
    compute_dtype = params["compute_dtype"]

    lead_shape = x.shape[:-1]
    x2d = x.reshape(-1, in_features)
    M = x2d.shape[0]

    TM = _choose_tile(M, tm, 8)
    M_pad = _round_up(M, TM)

    x_mm = x2d if compute_dtype is None else x2d.astype(compute_dtype)

    # LoRA left factor computed once per forward (rank ~ 4, negligible cost);
    # kept in f32 so the rank-r epilogue stays full precision.
    xa = jnp.dot(x2d, params["A"], preferred_element_type=jnp.float32)

    x_p = jnp.pad(x_mm, ((0, M_pad - M), (0, K_pad - in_features)))
    xa_p = jnp.pad(xa, ((0, M_pad - M), (0, 0)))

    grid = (M_pad // TM, N_pad // TN, K_pad // TK)

    out_p = pl.pallas_call(
        _lora_linear_kernel,
        out_shape=jax.ShapeDtypeStruct((M_pad, N_pad), x.dtype),
        grid_spec=pltpu.PrefetchScalarGridSpec(
            num_scalar_prefetch=0,
            grid=grid,
            in_specs=[
                pl.BlockSpec((TM, TK), lambda i, j, k: (i, k)),    # x
                pl.BlockSpec((TK, TN), lambda i, j, k: (k, j)),    # W^T
                pl.BlockSpec((1, TN), lambda i, j, k: (0, j)),     # bias
                pl.BlockSpec((TM, rank), lambda i, j, k: (i, 0)),  # x@A (f32)
                pl.BlockSpec((rank, TN), lambda i, j, k: (0, j)),  # alpha*B (f32)
            ],
            out_specs=pl.BlockSpec((TM, TN), lambda i, j, k: (i, j)),
            scratch_shapes=[pltpu.VMEM((TM, TN), jnp.float32)],
        ),
        compiler_params=pltpu.CompilerParams(
            dimension_semantics=("parallel", "parallel", "arbitrary"),
            vmem_limit_bytes=_default_vmem_limit_bytes(),
        ),
    )(x_p, params["wt_p"], params["b_p"], xa_p, params["bs_p"])

    return out_p[:M, :out_features].reshape(*lead_shape, out_features)


def _reference(x, w, b, A, B, alpha):
    return x @ w.T + b + alpha * (x @ A @ B)


def _check(batch, seq, in_features, out_features, rank, alpha, *,
           compute_dtype=None, atol=1e-4, rtol=1e-4, tm=512, tn=1024, tk=512):
    key = jax.random.PRNGKey(0)
    k_x, k_w, k_b, k_a, k_bb = jax.random.split(key, 5)

    x = jax.random.normal(k_x, (batch, seq, in_features), dtype=jnp.float32)
    w = jax.random.normal(k_w, (out_features, in_features), dtype=jnp.float32) * 0.1
    b = jax.random.normal(k_b, (out_features,), dtype=jnp.float32) * 0.1
    std_dev = 1.0 / jnp.sqrt(jnp.float32(rank))
    A = jax.random.normal(k_a, (in_features, rank), dtype=jnp.float32) * std_dev
    # The module zero-inits B; use a nonzero B so the LoRA path is exercised.
    B = jax.random.normal(k_bb, (rank, out_features), dtype=jnp.float32) * 0.1

    params = prepare_lora_linear_params(w, b, A, B, alpha, tn=tn, tk=tk,
                                        compute_dtype=compute_dtype)
    out = jax.block_until_ready(lora_linear_forward(x, params, tm=tm))

    ref = _reference(x, w, b, A, B, alpha)
    assert out.shape == ref.shape, (out.shape, ref.shape)
    assert jnp.allclose(out, ref, atol=atol, rtol=rtol), "mismatch vs reference"


if __name__ == "__main__":
    # Shapes implied by the module forward: x (batch, seq, in_features).
    _check(batch=2, seq=8, in_features=32, out_features=32, rank=4, alpha=2.0)
    # Multi-(i, j, k)-tile grid: K-resident accumulator + padding/slicing paths.
    _check(batch=2, seq=8, in_features=256, out_features=256, rank=4, alpha=2.0,
           tm=8, tn=128, tk=128)
    # bf16 compute path (f32 accumulation), looser tolerance.
    _check(batch=2, seq=8, in_features=256, out_features=256, rank=4, alpha=2.0,
           compute_dtype=jnp.bfloat16, atol=5e-2, rtol=5e-2,
           tm=8, tn=128, tk=128)

    print("KERNEL_OK")
</pallas_src>

<mosaic_0001>
module attributes {stable_mosaic.version = 11 : i64} {
  func.func @_lora_linear_kernel(%arg0: i32, %arg1: i32, %arg2: i32, %arg3: memref<16x128xf32, #tpu.memory_space<vmem>>, %arg4: memref<128x128xf32, #tpu.memory_space<vmem>>, %arg5: memref<1x128xf32, #tpu.memory_space<vmem>>, %arg6: memref<16x4xf32, #tpu.memory_space<vmem>>, %arg7: memref<4x128xf32, #tpu.memory_space<vmem>>, %arg8: memref<16x128xf32, #tpu.memory_space<vmem>>, %arg9: memref<16x128xf32, #tpu.memory_space<vmem>>) attributes {dimension_semantics = [#tpu.dimension_semantics<parallel>, #tpu.dimension_semantics<parallel>, #tpu.dimension_semantics<arbitrary>], iteration_bounds = array<i64: 1, 1, 1>, scalar_prefetch = 0 : i64, scratch_operands = 1 : i64, tpu.core_type = #tpu.core_type<tc>, window_params = [{transform_indices = @transform_0, window_bounds = array<i64: 16, 128>}, {transform_indices = @transform_1, window_bounds = array<i64: 128, 128>}, {transform_indices = @transform_2, window_bounds = array<i64: 1, 128>}, {transform_indices = @transform_3, window_bounds = array<i64: 16, 4>}, {transform_indices = @transform_4, window_bounds = array<i64: 4, 128>}, {transform_indices = @transform_5, window_bounds = array<i64: 16, 128>}]} {
    %c0 = arith.constant 0 : index
    %c0_0 = arith.constant 0 : index
    %0 = vector.load %arg3[%c0, %c0_0] : memref<16x128xf32, #tpu.memory_space<vmem>>, vector<16x128xf32>
    %c0_1 = arith.constant 0 : index
    %c0_2 = arith.constant 0 : index
    %1 = vector.load %arg4[%c0_1, %c0_2] : memref<128x128xf32, #tpu.memory_space<vmem>>, vector<128x128xf32>
    %cst = arith.constant dense<0.000000e+00> : vector<16x128xf32>
    %2 = tpu.matmul %0, %1, %cst {dimension_numbers = #tpu.dot_dimension_numbers<[1], [0], [0], [1], [0, 0, 1, 1], [], []>} : vector<16x128xf32>, vector<128x128xf32>, vector<16x128xf32> -> vector<16x128xf32>
    %c0_i32 = arith.constant 0 : i32
    %3 = arith.cmpi eq, %arg2, %c0_i32 : i32
    %4 = arith.extui %3 : i1 to i32
    %c0_i32_3 = arith.constant 0 : i32
    %5 = arith.cmpi ne, %4, %c0_i32_3 : i32
    scf.if %5 {
      %c0_8 = arith.constant 0 : index
      %c0_9 = arith.constant 0 : index
      %12 = vector.load %arg9[%c0_8, %c0_9] : memref<16x128xf32, #tpu.memory_space<vmem>>, vector<16x128xf32>
      tpu.vector_store %arg9[%c0_8, %c0_9], %2 {strides = array<i32>} : memref<16x128xf32, #tpu.memory_space<vmem>>, vector<16x128xf32>,
    } else {
    }
    %c0_i32_4 = arith.constant 0 : i32
    %6 = arith.cmpi sgt, %arg2, %c0_i32_4 : i32
    %7 = arith.extui %6 : i1 to i32
    %c0_i32_5 = arith.constant 0 : i32
    %8 = arith.cmpi ne, %7, %c0_i32_5 : i32
    scf.if %8 {
      %c0_8 = arith.constant 0 : index
      %c0_9 = arith.constant 0 : index
      %12 = vector.load %arg9[%c0_8, %c0_9] : memref<16x128xf32, #tpu.memory_space<vmem>>, vector<16x128xf32>
      %13 = arith.addf %12, %2 : vector<16x128xf32>
      %c0_10 = arith.constant 0 : index
      %c0_11 = arith.constant 0 : index
      %14 = vector.load %arg9[%c0_10, %c0_11] : memref<16x128xf32, #tpu.memory_space<vmem>>, vector<16x128xf32>
      tpu.vector_store %arg9[%c0_10, %c0_11], %13 {strides = array<i32>} : memref<16x128xf32, #tpu.memory_space<vmem>>, vector<16x128xf32>,
    } else {
    }
    %c0_i32_6 = arith.constant 0 : i32
    %9 = arith.cmpi eq, %arg2, %c0_i32_6 : i32
    %10 = arith.extui %9 : i1 to i32
    %c0_i32_7 = arith.constant 0 : i32
    %11 = arith.cmpi ne, %10, %c0_i32_7 : i32
    scf.if %11 {
      %c0_8 = arith.constant 0 : index
      %c0_9 = arith.constant 0 : index
      %12 = vector.load %arg6[%c0_8, %c0_9] : memref<16x4xf32, #tpu.memory_space<vmem>>, vector<16x4xf32>
      %c0_10 = arith.constant 0 : index
      %c0_11 = arith.constant 0 : index
      %13 = vector.load %arg7[%c0_10, %c0_11] : memref<4x128xf32, #tpu.memory_space<vmem>>, vector<4x128xf32>
      %cst_12 = arith.constant dense<0.000000e+00> : vector<16x128xf32>
      %14 = tpu.matmul %12, %13, %cst_12 {dimension_numbers = #tpu.dot_dimension_numbers<[1], [0], [0], [1], [0, 0, 1, 1], [], []>} : vector<16x4xf32>, vector<4x128xf32>, vector<16x128xf32> -> vector<16x128xf32>
      %c0_13 = arith.constant 0 : index
      %c0_14 = arith.constant 0 : index
      %15 = vector.load %arg9[%c0_13, %c0_14] : memref<16x128xf32, #tpu.memory_space<vmem>>, vector<16x128xf32>
      %c0_15 = arith.constant 0 : index
      %c0_16 = arith.constant 0 : index
      %16 = vector.load %arg5[%c0_15, %c0_16] : memref<1x128xf32, #tpu.memory_space<vmem>>, vector<1x128xf32>
      %17 = vector.broadcast %16 : vector<1x128xf32> to vector<16x128xf32>
      %18 = arith.addf %15, %17 : vector<16x128xf32>
      %19 = arith.addf %18, %14 : vector<16x128xf32>
      %c0_17 = arith.constant 0 : index
      %c0_18 = arith.constant 0 : index
      %20 = vector.load %arg8[%c0_17, %c0_18] : memref<16x128xf32, #tpu.memory_space<vmem>>, vector<16x128xf32>
      tpu.vector_store %arg8[%c0_17, %c0_18], %19 {strides = array<i32>} : memref<16x128xf32, #tpu.memory_space<vmem>>, vector<16x128xf32>,
    } else {
    }
    return
  }
  func.func @transform_0(%arg0: i32, %arg1: i32, %arg2: i32) -> (i32, i32) {
    %c0_i32 = arith.constant 0 : i32
    return %arg0, %arg2 : i32, i32
  }
  func.func @transform_1(%arg0: i32, %arg1: i32, %arg2: i32) -> (i32, i32) {
    %c0_i32 = arith.constant 0 : i32
    return %arg2, %arg1 : i32, i32
  }
  func.func @transform_2(%arg0: i32, %arg1: i32, %arg2: i32) -> (i32, i32) {
    %c0_i32 = arith.constant 0 : i32
    %c0_i32_0 = arith.constant 0 : i32
    return %c0_i32, %arg1 : i32, i32
  }
  func.func @transform_3(%arg0: i32, %arg1: i32, %arg2: i32) -> (i32, i32) {
    %c0_i32 = arith.constant 0 : i32
    %c0_i32_0 = arith.constant 0 : i32
    return %arg0, %c0_i32 : i32, i32
  }
  func.func @transform_4(%arg0: i32, %arg1: i32, %arg2: i32) -> (i32, i32) {
    %c0_i32 = arith.constant 0 : i32
    %c0_i32_0 = arith.constant 0 : i32
    return %c0_i32, %arg1 : i32, i32
  }
  func.func @transform_5(%arg0: i32, %arg1: i32, %arg2: i32) -> (i32, i32) {
    %c0_i32 = arith.constant 0 : i32
    return %arg0, %arg1 : i32, i32
  }
}

</mosaic_0001>

<llo_original>
// kernel: tpu_custom_call.1
$region0: #{tpu_custom_call.1}
  #allocation0 [shape = 'u32[]', space=smem, size = 0x4, offset = 0x4, fixed_abs, tag = 'smem constant byte address 0x4 - core index']
  #allocation1 [shape = 'u32[72,128]{1,0:T(1,128)}', space=vmem, size = 0x9000, scoped, tag = 'internal scratch']
  #allocation2 [shape = 'f32[16,128]{1,0:T(8,128)}', space=vmem, size = 0x2000, scoped, tag = 'scratch operand']
  %s0 = inlined_call_operand.vmem [shape: f32[16,128], index: 0, kind: input, shape index: {}]
  %s1 = inlined_call_operand.hbm [shape: f32[128,128], index: 1, kind: input, shape index: {}]
  %s2 = inlined_call_operand.vmem [shape: f32[1,128], index: 2, kind: input, shape index: {}]
  %s3 = inlined_call_operand.vmem [shape: f32[16,4], index: 3, kind: input, shape index: {}]
  %s4 = inlined_call_operand.vmem [shape: f32[4,128], index: 4, kind: input, shape index: {}]
  %s5 = inlined_call_operand.hbm [shape: f32[16,128], index: 5, kind: output, shape index: {}]
  %s6 = sld [smem:[#allocation0]]
  $region46: #{tpu_custom_call.1} parent=0
    _
  %s8 = ssub.s32 1, %s6
  %s9 = scalar_select 0, %s8, %s6
  $region1: #{tpu_custom_call.1} parent=0
    #allocation3 [shape = 'u8[65536]{0}', space=vmem, size = 0x10000, scoped, tag = 'input window, operand 1, single buffered']
    #allocation4 [shape = 's32[1]{0}', space=sflag, size = 0x4, scoped, tag = 'scoped memory for tpu_custom_call.1']
    #allocation5 [shape = 's32[1]{0}', space=sflag, size = 0x4, scoped, tag = 'scoped memory for tpu_custom_call.1']
    #allocation6 [shape = 'u8[8192]{0}', space=vmem, size = 0x2000, scoped, tag = 'output window, operand 0, single buffered']
    %10 = vsyncpa [#allocation4], 0
    %11 = vsyncpa [#allocation5], 0
    // Predicated region
    $region2: #{tpu_custom_call.1} parent=1 // pred_check
      _
    $region3: #{tpu_custom_call.1} parent=1 // pred_check_branch
      %13 = sbr.rel (0) target = $region5
    $region4: #{tpu_custom_call.1} parent=1 // pred_region
      _
    $region5: #{tpu_custom_call.1} parent=1 // pred_fallthru
      _
    // Predicated region
    $region6: #{tpu_custom_call.1} parent=1 // pred_check
      _
    $region7: #{tpu_custom_call.1} parent=1 // pred_check_branch
      %15 = sbr.rel (0) target = $region9
    $region8: #{tpu_custom_call.1} parent=1 // pred_region
      %17 = vsyncadd [#allocation4], 0
      %s18 = sshll.u32 %s1, 4
      %s19 = int_to_ptr.hbm [resolvable:$true] %s18
      %s20 = sshll.u32 [#allocation3], 4
      %s21 = int_to_ptr.vmem [resolvable:$true] %s20
      %26 = dma.hbm_to_vmem [thread:$0]  %s19, 2048, %s21, [#allocation4], 128, 128, 8
    $region9: #{tpu_custom_call.1} parent=1 // pred_fallthru
      _
    // Predicated region
    $region10: #{tpu_custom_call.1} parent=1 // pred_check
      _
    $region11: #{tpu_custom_call.1} parent=1 // pred_check_branch
      %28 = sbr.rel (0) target = $region13
    $region12: #{tpu_custom_call.1} parent=1 // pred_region
      _
    $region13: #{tpu_custom_call.1} parent=1 // pred_fallthru
      _
    // Predicated region
    $region14: #{tpu_custom_call.1} parent=1 // pred_check
      _
    $region15: #{tpu_custom_call.1} parent=1 // pred_check_branch
      %30 = sbr.rel (0) target = $region17
    $region16: #{tpu_custom_call.1} parent=1 // pred_region
      _
    $region17: #{tpu_custom_call.1} parent=1 // pred_fallthru
      _
    // Predicated region
    $region18: #{tpu_custom_call.1} parent=1 // pred_check
      _
    $region19: #{tpu_custom_call.1} parent=1 // pred_check_branch
      %32 = sbr.rel (0) target = $region21
    $region20: #{tpu_custom_call.1} parent=1 // pred_region
      _
    $region21: #{tpu_custom_call.1} parent=1 // pred_fallthru
      _
    // Predicated region
    $region22: #{tpu_custom_call.1} parent=1 // pred_check
      _
    $region23: #{tpu_custom_call.1} parent=1 // pred_check_branch
      %34 = sbr.rel (0) target = $region25
    $region24: #{tpu_custom_call.1} parent=1 // pred_region
      %36 = dma.done [#allocation4], 2048
    $region25: #{tpu_custom_call.1} parent=1 // pred_fallthru
      _
    %v37 = vld [vmem:[%s0] sm:$0xff]
    %v38 = vld [vmem:[%s0 + $0x8] sm:$0xff]
    %v39 = vld [vmem:[#allocation3] sm:$0xff]
    %v40 = vld [vmem:[#allocation3 + $0x8] sm:$0xff]
    %v41 = vld [vmem:[#allocation3 + $0x10] sm:$0xff]
    %v42 = vld [vmem:[#allocation3 + $0x18] sm:$0xff]
    %v43 = vld [vmem:[#allocation3 + $0x20] sm:$0xff]
    %v44 = vld [vmem:[#allocation3 + $0x28] sm:$0xff]
    %v45 = vld [vmem:[#allocation3 + $0x30] sm:$0xff]
    %v46 = vld [vmem:[#allocation3 + $0x38] sm:$0xff]
    %v47 = vld [vmem:[#allocation3 + $0x40] sm:$0xff]
    %v48 = vld [vmem:[#allocation3 + $0x48] sm:$0xff]
    %v49 = vld [vmem:[#allocation3 + $0x50] sm:$0xff]
    %v50 = vld [vmem:[#allocation3 + $0x58] sm:$0xff]
    %v51 = vld [vmem:[#allocation3 + $0x60] sm:$0xff]
    %v52 = vld [vmem:[#allocation3 + $0x68] sm:$0xff]
    %v53 = vld [vmem:[#allocation3 + $0x70] sm:$0xff]
    %v54 = vld [vmem:[#allocation3 + $0x78] sm:$0xff]
    %55 = vmatpush.msra.mxu0 %v54
    %56 = vmatpush.msra.mxu0 %v53
    %57 = vmatpush.msra.mxu0 %v52
    %58 = vmatpush.msra.mxu0 %v51
    %59 = vmatpush.msra.mxu0 %v50
    %60 = vmatpush.msra.mxu0 %v49
    %61 = vmatpush.msra.mxu0 %v48
    %62 = vmatpush.msra.mxu0 %v47
    %63 = vmatpush.msra.mxu0 %v46
    %64 = vmatpush.msra.mxu0 %v45
    %65 = vmatpush.msra.mxu0 %v44
    %66 = vmatpush.msra.mxu0 %v43
    %67 = vmatpush.msra.mxu0 %v42
    %68 = vmatpush.msra.mxu0 %v41
    %69 = vmatpush.msra.mxu0 %v40
    %70 = vmatpush.msra.mxu0 %v39
    %71 = vmatmul.f32.gmra.mxu0 %v37
    %v72 = vpop.f32.mrf.mxu0
    %v73 = vadd.f32 0.0, %v72
    %74 = vmatmul.f32.gmra.mxu0 %v38
    %v75 = vpop.f32.mrf.mxu0
    %v76 = vadd.f32 0.0, %v75
    %77 = vdwg.mxu0
    %p78 = scmp.eq.s32.totalorder 0, 0
    // Predicated region
    $region26: #{tpu_custom_call.1} parent=1 // pred_check
      %p79 = pneg %p78
    $region27: #{tpu_custom_call.1} parent=1 // pred_check_branch
      %81 = sbr.rel (%p79) target = $region29
    $region28: #{tpu_custom_call.1} parent=1 // pred_region
      %82 = vst [vmem:[#allocation2] sm:$0xff] %v73
      %83 = vst [vmem:[#allocation2 + $0x8] sm:$0xff] %v76
    $region29: #{tpu_custom_call.1} parent=1 // pred_fallthru
      _
    %p84 = scmp.gt.s32.totalorder 0, 0
    // Predicated region
    $region30: #{tpu_custom_call.1} parent=1 // pred_check
      %p85 = pneg %p84
    $region31: #{tpu_custom_call.1} parent=1 // pred_check_branch
      %87 = sbr.rel (%p85) target = $region33
    $region32: #{tpu_custom_call.1} parent=1 // pred_region
      %v88 = vld [vmem:[#allocation2] sm:$0xff]
      %v89 = vld [vmem:[#allocation2 + $0x8] sm:$0xff]
      %v90 = vadd.f32 %v88, %v73
      %v91 = vadd.f32 %v89, %v76
      %92 = vst [vmem:[#allocation2] sm:$0xff] %v90
      %93 = vst [vmem:[#allocation2 + $0x8] sm:$0xff] %v91
    $region33: #{tpu_custom_call.1} parent=1 // pred_fallthru
      _
    // Predicated region
    $region34: #{tpu_custom_call.1} parent=1 // pred_check
      %p94 = pneg %p78
    $region35: #{tpu_custom_call.1} parent=1 // pred_check_branch
      %96 = sbr.rel (%p94) target = $region37
    $region36: #{tpu_custom_call.1} parent=1 // pred_region
      %v97 = vld [vmem:[%s3] sm:$0xff]
      %v98 = vld [vmem:[%s3 + $0x8] sm:$0xff]
      %v99 = vld [vmem:[%s4] sm:$0xf]
      %vm100 = vcmask 31744
      %v102 = vsel %vm100, %v97, 0
      %v105 = vsel %vm100, %v98, 0
      %vm107 = vcmask 1043456
      %v109 = vsel %vm107, %v99, 0
      %111 = vmatpush.msra.mxu0 0.0
      %112 = vmatpush.msra.mxu0 0.0
      %113 = vmatpush.msra.mxu0 0.0
      %114 = vmatpush.msra.mxu0 0.0
      %115 = vmatpush.msra.mxu0 0.0
      %116 = vmatpush.msra.mxu0 0.0
      %117 = vmatpush.msra.mxu0 0.0
      %118 = vmatpush.msra.mxu0 0.0
      %119 = vmatpush.msra.mxu0 0.0
      %120 = vmatpush.msra.mxu0 0.0
      %121 = vmatpush.msra.mxu0 0.0
      %122 = vmatpush.msra.mxu0 0.0
      %123 = vmatpush.msra.mxu0 0.0
      %124 = vmatpush.msra.mxu0 0.0
      %125 = vmatpush.msra.mxu0 0.0
      %126 = vmatpush.msra.mxu0 %v109
      %127 = vmatmul.f32.gmra.mxu0 %v102
      %v128 = vpop.f32.mrf.mxu0
      %v129 = vadd.f32 0.0, %v128
      %130 = vmatmul.f32.gmra.mxu0 %v105
      %v131 = vpop.f32.mrf.mxu0
      %v132 = vadd.f32 0.0, %v131
      %133 = vdwg.mxu0
      %v134 = vld [vmem:[#allocation2] sm:$0xff]
      %v135 = vld [vmem:[#allocation2 + $0x8] sm:$0xff]
      %v136 = vld [vmem:[%s2] sm:$0x1]
      %v138 = vperm.slane %v136, 0
      %v140 = vadd.f32 %v134, %v138
      %v141 = vadd.f32 %v135, %v138
      %v142 = vadd.f32 %v140, %v129
      %v143 = vadd.f32 %v141, %v132
      %144 = vst [vmem:[#allocation6] sm:$0xff] %v142
      %145 = vst [vmem:[#allocation6 + $0x8] sm:$0xff] %v143
    $region37: #{tpu_custom_call.1} parent=1 // pred_fallthru
      _
    // Predicated region
    $region38: #{tpu_custom_call.1} parent=1 // pred_check
      _
    $region39: #{tpu_custom_call.1} parent=1 // pred_check_branch
      %147 = sbr.rel (0) target = $region41
    $region40: #{tpu_custom_call.1} parent=1 // pred_region
      %149 = vsyncadd [#allocation5], 0
      %s150 = sshll.u32 [#allocation6], 4
      %s151 = int_to_ptr.vmem [resolvable:$true] %s150
      %s152 = sshll.u32 %s5, 4
      %s153 = int_to_ptr.hbm [resolvable:$true] %s152
      %158 = dma.vmem_to_hbm [thread:$0]  %s151, 256, %s153, [#allocation5], 128, 128, 8
    $region41: #{tpu_custom_call.1} parent=1 // pred_fallthru
      _
    // Predicated region
    $region42: #{tpu_custom_call.1} parent=1 // pred_check
      _
    $region43: #{tpu_custom_call.1} parent=1 // pred_check_branch
      %160 = sbr.rel (0) target = $region45
    $region44: #{tpu_custom_call.1} parent=1 // pred_region
      %162 = dma.done [#allocation5], 256
    $region45: #{tpu_custom_call.1} parent=1 // pred_fallthru
      _
    %163 = vsyncpa [#allocation4], 1
    %164 = vsyncpa [#allocation5], 1

</llo_original>
